<compile_context>
chip_gen: v7x
topology: tpu7x:2x2x1
jax: 0.10.0
libtpu: 0.0.40
codegen_flags: <defaults>
</compile_context>

<pallas_src>
import jax
import jax.numpy as jnp
from jax.experimental import pallas as pl
from jax.experimental.pallas import tpu as pltpu

IN_FEATURES = 36
OUT_FEATURES = 1
DEFAULT_TILE_B = 8192


def _linear_kernel(x_ref, w_ref, b_ref, o_ref):
    # x_ref: (TILE_B, F) activation tile (native dtype, upcast here)
    # w_ref: (8, F) f32 weight; row 0 = real weight row, rows 1..7 zero pad
    # b_ref: (1,)   f32 bias scalar in SMEM
    # o_ref: (1, TILE_B) lane-dense f32 output row (batch on the lane axis)
    x = x_ref[...].astype(jnp.float32)
    w = w_ref[...].astype(jnp.float32)
    # NT matmul: contract the 36-feature axis of both operands.  The output
    # puts batch on the lane axis -> naturally lane-dense store, no relayout.
    acc = jax.lax.dot_general(
        w, x,
        dimension_numbers=(((1,), (1,)), ((), ())),
        preferred_element_type=jnp.float32,
    )                                              # (8, TILE_B)
    o_ref[...] = (acc[0:1, :] + b_ref[0]).astype(o_ref.dtype)


def linear_forward(x, weight, bias, *, tile_b=DEFAULT_TILE_B):
    """Pallas equivalent of torch.nn.Linear(36, 1): y = x @ weight.T + bias."""
    B, F = x.shape
    assert F == IN_FEATURES and weight.shape == (OUT_FEATURES, IN_FEATURES)

    # Tiny once-per-call prep: pad the single weight row to 8 sublanes so the
    # MXU LHS is naturally aligned; bias becomes an SMEM scalar.
    w8 = jnp.zeros((8, F), jnp.float32).at[0].set(
        weight.reshape(F).astype(jnp.float32))
    b1 = bias.reshape(OUT_FEATURES).astype(jnp.float32)

    if B <= tile_b:
        tb = B                       # single full-array block
    else:
        tb = tile_b
        assert tb % 128 == 0, "tile_b must be a multiple of 128 when tiling"
    num_tiles = pl.cdiv(B, tb)
    padded_b = num_tiles * tb        # lane-dense output slab; tail sliced off

    out_row = pl.pallas_call(
        _linear_kernel,
        out_shape=jax.ShapeDtypeStruct((1, padded_b), jnp.float32),
        grid=(num_tiles,),
        in_specs=[
            pl.BlockSpec((tb, F), lambda i: (i, 0)),      # streamed batch tiles
            pl.BlockSpec((8, F), lambda i: (0, 0)),       # resident weight
            pl.BlockSpec(memory_space=pltpu.MemorySpace.SMEM),  # bias scalar
        ],
        out_specs=pl.BlockSpec((1, tb), lambda i: (0, i)),
        compiler_params=pltpu.CompilerParams(
            dimension_semantics=("parallel",),            # v7x: use both TCs
            vmem_limit_bytes=32 * 1024 * 1024,
        ),
    )(x, w8, b1)

    # (1, padded_B) lane-dense slab -> (B, 1); trivial 4 B/row copy in XLA.
    return out_row[0, :B].reshape(B, OUT_FEATURES)


if __name__ == "__main__":
    key = jax.random.PRNGKey(0)
    kx, kw, kb, kx2 = jax.random.split(key, 4)

    # torch.nn.Linear default init: U(-1/sqrt(fan_in), 1/sqrt(fan_in))
    bound = 1.0 / (IN_FEATURES ** 0.5)
    weight = jax.random.uniform(kw, (OUT_FEATURES, IN_FEATURES),
                                minval=-bound, maxval=bound, dtype=jnp.float32)
    bias = jax.random.uniform(kb, (OUT_FEATURES,),
                              minval=-bound, maxval=bound, dtype=jnp.float32)

    fwd = jax.jit(linear_forward, static_argnames=("tile_b",))

    # Small single-tile case (the module accepts any (B, 36)).
    x_small = jax.random.normal(kx, (8, IN_FEATURES), dtype=jnp.float32)
    out_small = jax.block_until_ready(fwd(x_small, weight, bias))
    ref_small = x_small @ weight.T + bias
    assert out_small.shape == (8, OUT_FEATURES) and out_small.dtype == jnp.float32
    assert jnp.allclose(out_small, ref_small, atol=1e-4, rtol=1e-4)

    # Multi-tile case: exercises the pipelined grid and a partial trailing tile.
    x_big = jax.random.normal(kx2, (300, IN_FEATURES), dtype=jnp.float32)
    out_big = jax.block_until_ready(fwd(x_big, weight, bias, tile_b=128))
    ref_big = x_big @ weight.T + bias
    assert out_big.shape == (300, OUT_FEATURES)
    assert jnp.allclose(out_big, ref_big, atol=1e-4, rtol=1e-4)

    print("KERNEL_OK")
</pallas_src>

<mosaic_0001>
module attributes {stable_mosaic.version = 11 : i64} {
  func.func @_linear_kernel(%arg0: i32, %arg1: memref<8x36xf32, #tpu.memory_space<vmem>>, %arg2: memref<8x36xf32, #tpu.memory_space<vmem>>, %arg3: memref<1xf32, #tpu.memory_space<smem>>, %arg4: memref<1x8xf32, #tpu.memory_space<vmem>>) attributes {dimension_semantics = [#tpu.dimension_semantics<parallel>], iteration_bounds = array<i64: 1>, scalar_prefetch = 0 : i64, scratch_operands = 0 : i64, tpu.core_type = #tpu.core_type<tc>, window_params = [{transform_indices = @transform_0, window_bounds = array<i64: 8, 36>}, {pipeline_mode = #tpu.pipeline_mode<synchronous>, transform_indices = @transform_1, window_bounds = array<i64: 8, 36>}, {transform_indices = @transform_2, window_bounds = array<i64: 1>}, {transform_indices = @transform_3, window_bounds = array<i64: 1, 8>}]} {
    %c0 = arith.constant 0 : index
    %c0_0 = arith.constant 0 : index
    %0 = vector.load %arg1[%c0, %c0_0] : memref<8x36xf32, #tpu.memory_space<vmem>>, vector<8x36xf32>
    %c0_1 = arith.constant 0 : index
    %c0_2 = arith.constant 0 : index
    %1 = vector.load %arg2[%c0_1, %c0_2] : memref<8x36xf32, #tpu.memory_space<vmem>>, vector<8x36xf32>
    %cst = arith.constant dense<0.000000e+00> : vector<8x8xf32>
    %2 = tpu.matmul %1, %0, %cst {dimension_numbers = #tpu.dot_dimension_numbers<[1], [1], [0], [0], [0, 0, 1, 0], [], []>} : vector<8x36xf32>, vector<8x36xf32>, vector<8x8xf32> -> vector<8x8xf32>
    %3 = vector.extract_strided_slice %2 {offsets = [0, 0], sizes = [1, 8], strides = [1, 1]} : vector<8x8xf32> to vector<1x8xf32>
    %c0_3 = arith.constant 0 : index
    %4 = memref.load %arg3[%c0_3] : memref<1xf32, #tpu.memory_space<smem>>
    %5 = vector.broadcast %4 : f32 to vector<1x8xf32>
    %6 = arith.addf %3, %5 : vector<1x8xf32>
    %c0_4 = arith.constant 0 : index
    %c0_5 = arith.constant 0 : index
    %7 = vector.load %arg4[%c0_4, %c0_5] : memref<1x8xf32, #tpu.memory_space<vmem>>, vector<1x8xf32>
    tpu.vector_store %arg4[%c0_4, %c0_5], %6 {strides = array<i32>} : memref<1x8xf32, #tpu.memory_space<vmem>>, vector<1x8xf32>,
    return
  }
  func.func @transform_0(%arg0: i32) -> (i32, i32) {
    %c0_i32 = arith.constant 0 : i32
    %c0_i32_0 = arith.constant 0 : i32
    return %arg0, %c0_i32 : i32, i32
  }
  func.func @transform_1(%arg0: i32) -> (i32, i32) {
    %c0_i32 = arith.constant 0 : i32
    %c0_i32_0 = arith.constant 0 : i32
    %c0_i32_1 = arith.constant 0 : i32
    return %c0_i32, %c0_i32_0 : i32, i32
  }
  func.func @transform_2(%arg0: i32) -> i32 {
    %c0_i32 = arith.constant 0 : i32
    %c0_i32_0 = arith.constant 0 : i32
    return %c0_i32 : i32
  }
  func.func @transform_3(%arg0: i32) -> (i32, i32) {
    %c0_i32 = arith.constant 0 : i32
    %c0_i32_0 = arith.constant 0 : i32
    return %c0_i32, %arg0 : i32, i32
  }
}

</mosaic_0001>

<llo_original>
// kernel: linear_forward.1
$region0: #{linear_forward.1}
  #allocation0 [shape = 'u32[]', space=smem, size = 0x4, offset = 0x4, fixed_abs, tag = 'smem constant byte address 0x4 - core index']
  #allocation1 [shape = 'u32[144,128]{1,0:T(1,128)}', space=vmem, size = 0x12000, scoped, tag = 'internal scratch']
  #allocation2 [shape = 'f32[1]{0:T(128)S(6)}', space=smem, size = 0x200, scoped, tag = 'scoped memory for linear_forward.1']
  %s0 = inlined_call_operand.vmem [shape: f32[8,36], index: 0, kind: input, shape index: {}]
  %s1 = inlined_call_operand.vmem [shape: f32[8,36], index: 1, kind: input, shape index: {}]
  %s2 = inlined_call_operand.<no memory space> [shape: f32[1], index: 2, kind: input, shape index: {}]
  %s3 = inlined_call_operand.hbm [shape: f32[1,8], index: 3, kind: output, shape index: {}]
  %s4 = sld [smem:[#allocation0]]
  $region22: #{linear_forward.1} parent=0
    _
  %s6 = ssub.s32 1, %s4
  %s7 = scalar_select 0, %s6, %s4
  %8 = sst [smem:[#allocation2]] %s2
  $region1: #{linear_forward.1} parent=0
    #allocation3 [shape = 'u8[512]{0}', space=vmem, size = 0x400, scoped, tag = 'output window, operand 0, single buffered']
    #allocation4 [shape = 's32[1]{0}', space=sflag, size = 0x4, scoped, tag = 'scoped memory for linear_forward.1']
    %9 = vsyncpa [#allocation4], 0
    // Predicated region
    $region2: #{linear_forward.1} parent=1 // pred_check
      _
    $region3: #{linear_forward.1} parent=1 // pred_check_branch
      %11 = sbr.rel (0) target = $region5
    $region4: #{linear_forward.1} parent=1 // pred_region
      _
    $region5: #{linear_forward.1} parent=1 // pred_fallthru
      _
    // Predicated region
    $region6: #{linear_forward.1} parent=1 // pred_check
      _
    $region7: #{linear_forward.1} parent=1 // pred_check_branch
      %13 = sbr.rel (0) target = $region9
    $region8: #{linear_forward.1} parent=1 // pred_region
      _
    $region9: #{linear_forward.1} parent=1 // pred_fallthru
      _
    // Predicated region
    $region10: #{linear_forward.1} parent=1 // pred_check
      _
    $region11: #{linear_forward.1} parent=1 // pred_check_branch
      %15 = sbr.rel (0) target = $region13
    $region12: #{linear_forward.1} parent=1 // pred_region
      _
    $region13: #{linear_forward.1} parent=1 // pred_fallthru
      _
    %v16 = vld [vmem:[%s0] sm:$0xff]
    %v17 = vld [vmem:[%s1] sm:$0xff]
    %vm18 = vcmask 293888
    %v20 = vsel %vm18, %v17, 0
    %v23 = vsel %vm18, %v16, 0
    %25 = vmatprep.subr.mxu0 0.0
    %26 = vmatpush1.xpose.msra.mxu0 %v23
    %27 = vmatprep.subr.mxu0 0.0
    %28 = vmatpush1.xpose.msra.mxu0 0.0
    %29 = vmatprep.subr.mxu0 0.0
    %30 = vmatpush1.xpose.msra.mxu0 0.0
    %31 = vmatprep.subr.mxu0 0.0
    %32 = vmatpush1.xpose.msra.mxu0 0.0
    %33 = vmatprep.subr.mxu0 0.0
    %34 = vmatpush1.xpose.msra.mxu0 0.0
    %35 = vmatprep.subr.mxu0 0.0
    %36 = vmatpush1.xpose.msra.mxu0 0.0
    %37 = vmatprep.subr.mxu0 0.0
    %38 = vmatpush1.xpose.msra.mxu0 0.0
    %39 = vmatprep.subr.mxu0 0.0
    %40 = vmatpush1.xpose.msra.mxu0 0.0
    %41 = vmatprep.subr.mxu0 0.0
    %42 = vmatpush1.xpose.msra.mxu0 0.0
    %43 = vmatprep.subr.mxu0 0.0
    %44 = vmatpush1.xpose.msra.mxu0 0.0
    %45 = vmatprep.subr.mxu0 0.0
    %46 = vmatpush1.xpose.msra.mxu0 0.0
    %47 = vmatprep.subr.mxu0 0.0
    %48 = vmatpush1.xpose.msra.mxu0 0.0
    %49 = vmatprep.subr.mxu0 0.0
    %50 = vmatpush1.xpose.msra.mxu0 0.0
    %51 = vmatprep.subr.mxu0 0.0
    %52 = vmatpush1.xpose.msra.mxu0 0.0
    %53 = vmatprep.subr.mxu0 0.0
    %54 = vmatpush1.xpose.msra.mxu0 0.0
    %55 = vmatprep.subr.mxu0 0.0
    %56 = vmatpush1.xpose.msra.mxu0 0.0
    %57 = vmatprep.subr.mxu0 0.0
    %58 = vmatpush1.xpose.msra.mxu0 0.0
    %59 = vmatprep.subr.mxu0 0.0
    %60 = vmatpush1.xpose.msra.mxu0 0.0
    %61 = vmatprep.subr.mxu0 0.0
    %62 = vmatpush1.xpose.msra.mxu0 0.0
    %63 = vmatprep.subr.mxu0 0.0
    %64 = vmatpush1.xpose.msra.mxu0 0.0
    %65 = vmatprep.subr.mxu0 0.0
    %66 = vmatpush1.xpose.msra.mxu0 0.0
    %67 = vmatprep.subr.mxu0 0.0
    %68 = vmatpush1.xpose.msra.mxu0 0.0
    %69 = vmatprep.subr.mxu0 0.0
    %70 = vmatpush1.xpose.msra.mxu0 0.0
    %71 = vmatprep.subr.mxu0 0.0
    %72 = vmatpush1.xpose.msra.mxu0 0.0
    %73 = vmatprep.subr.mxu0 0.0
    %74 = vmatpush1.xpose.msra.mxu0 0.0
    %75 = vmatprep.subr.mxu0 0.0
    %76 = vmatpush1.xpose.msra.mxu0 0.0
    %77 = vmatprep.subr.mxu0 0.0
    %78 = vmatpush1.xpose.msra.mxu0 0.0
    %79 = vmatprep.subr.mxu0 0.0
    %80 = vmatpush1.xpose.msra.mxu0 0.0
    %81 = vmatprep.subr.mxu0 0.0
    %82 = vmatpush1.xpose.msra.mxu0 0.0
    %83 = vmatprep.subr.mxu0 0.0
    %84 = vmatpush1.xpose.msra.mxu0 0.0
    %85 = vmatprep.subr.mxu0 0.0
    %86 = vmatpush1.xpose.msra.mxu0 0.0
    %87 = vmatprep.subr.mxu0 0.0
    %88 = vmatpush1.xpose.msra.mxu0 0.0
    %89 = vmatprep.mubr.f32.mxu0 0.0
    %90 = vmatmul.mubr.f32.gmra.mrb[0].mxu0 %v20
    %v91 = vpop.f32.mrb[0].mxu0
    %v92 = vadd.f32 0.0, %v91
    %v93 = vpop.f32.mrb[0].mxu0
    %94 = vdwg.mxu0
    %s95 = sld [smem:[#allocation2]]
    %v96 = vstv %s95
    %v97 = vadd.f32 %v92, %v96
    %vm98 = vcmask 57344
    %99 = vst.msk [vmem:[#allocation3] sm:$0x1] %vm98, %v97
    // Predicated region
    $region14: #{linear_forward.1} parent=1 // pred_check
      _
    $region15: #{linear_forward.1} parent=1 // pred_check_branch
      %101 = sbr.rel (0) target = $region17
    $region16: #{linear_forward.1} parent=1 // pred_region
      %s103 = ssub.s32 16, 16
      %104 = vsyncadd [#allocation4], %s103
      %s106 = sshll.u32 [#allocation3], 4
      %s107 = int_to_ptr.vmem [resolvable:$true] %s106
      %109 = dma.vmem_to_hbm [thread:$0]  %s107, 16, %s3, [#allocation4]
    $region17: #{linear_forward.1} parent=1 // pred_fallthru
      _
    // Predicated region
    $region18: #{linear_forward.1} parent=1 // pred_check
      _
    $region19: #{linear_forward.1} parent=1 // pred_check_branch
      %111 = sbr.rel (0) target = $region21
    $region20: #{linear_forward.1} parent=1 // pred_region
      %112 = dma.done [#allocation4], 16
    $region21: #{linear_forward.1} parent=1 // pred_fallthru
      _
    %113 = vsyncpa [#allocation4], 1

</llo_original>
